<compile_context>
chip_gen: v7x
topology: tpu7x:2x2x1
jax: 0.10.0
libtpu: 0.0.40
codegen_flags: <defaults>
</compile_context>

<pallas_src>
import functools

import jax
import jax.numpy as jnp
from jax import lax
from jax.experimental import pallas as pl
from jax.experimental.pallas import tpu as pltpu


def _round_up(x, m):
    return (x + m - 1) // m * m


def _gelu_f32(h, approximate):
    if approximate:
        # tanh GELU (goes to the EUP slot; effectively free under the MXU)
        c = jnp.float32(0.7978845608028654)  # sqrt(2/pi)
        return 0.5 * h * (1.0 + jnp.tanh(c * (h + jnp.float32(0.044715) * h * h * h)))
    # exact GELU (matches torch.nn.GELU default): 0.5*x*(1+erf(x/sqrt(2)))
    inv_sqrt2 = jnp.float32(0.7071067811865476)
    return 0.5 * h * (1.0 + lax.erf(h * inv_sqrt2))


def _mlp_kernel_resident(x_ref, w1_ref, b1_ref, w2_ref, b2_ref, o_ref, *,
                         approximate_gelu):
    # Grid: (row tiles [parallel],). Weights have constant index maps -> DMA'd once.
    # x_ref:  (tm, Cin_pad)      w1_ref: (Cin_pad, H_pad)   b1_ref: (1, H_pad) f32
    # w2_ref: (H_pad, Cout_pad)  b2_ref: (1, Cout_pad) f32  o_ref:  (tm, Cout_pad)
    h = jnp.dot(x_ref[...], w1_ref[...], preferred_element_type=jnp.float32)
    h = _gelu_f32(h + b1_ref[...], approximate_gelu)
    # dropout p=0.0 is the identity (eval semantics)
    out = jnp.dot(h.astype(w2_ref.dtype), w2_ref[...],
                  preferred_element_type=jnp.float32)
    o_ref[...] = (out + b2_ref[...]).astype(o_ref.dtype)


def _mlp_kernel_streamed(x_ref, w1_ref, b1_ref, w2_ref, b2_ref, o_ref, acc_ref, *,
                         approximate_gelu):
    # Grid: (row tiles [parallel], hidden chunks [arbitrary]).
    # acc_ref: (tm, Cout_pad) f32 accumulator over hidden chunks.
    j = pl.program_id(1)

    @pl.when(j == 0)
    def _():
        acc_ref[...] = jnp.zeros_like(acc_ref)

    h = jnp.dot(x_ref[...], w1_ref[...], preferred_element_type=jnp.float32)
    h = _gelu_f32(h + b1_ref[...], approximate_gelu)
    acc_ref[...] += jnp.dot(h.astype(w2_ref.dtype), w2_ref[...],
                            preferred_element_type=jnp.float32)

    @pl.when(j == pl.num_programs(1) - 1)
    def _():
        o_ref[...] = (acc_ref[...] + b2_ref[...]).astype(o_ref.dtype)


def _pick_vmem_limit():
    """Generation-aware scoped-VMEM limit with headroom for the rest of the program."""
    try:
        cap = int(pltpu.get_tpu_info().vmem_capacity_bytes)
    except Exception:
        cap = 64 << 20  # conservative (v7x-sized) fallback
    return min(100 << 20, int(cap * 0.8))


def mlp_pallas(x, w1, b1, w2, b2, *, tm_max=512, th_max=2048,
               compute_dtype="auto", approximate_gelu=False,
               force_streaming=False, vmem_limit_bytes=None):
    """Fused MLP forward.

    x: (..., in_features); w1: (hidden, in); b1: (hidden,); w2: (out, hidden); b2: (out,)
    (nn.Linear layout).  compute_dtype: "auto" -> bf16 MXU inputs when x is f32
    (f32 accumulation kept), None -> keep caller dtype, or an explicit dtype.
    Output keeps the original x dtype.
    """
    in_features = x.shape[-1]
    hidden = w1.shape[0]
    out_features = w2.shape[0]

    lead_shape = x.shape[:-1]
    M = 1
    for d in lead_shape:
        M *= d

    out_dtype = x.dtype
    if compute_dtype == "auto":
        compute_dtype = jnp.bfloat16 if x.dtype == jnp.float32 else None
    if compute_dtype is not None:
        x = x.astype(compute_dtype)
        w1 = w1.astype(compute_dtype)
        w2 = w2.astype(compute_dtype)

    it = jnp.dtype(x.dtype).itemsize          # compute-dtype itemsize
    out_it = jnp.dtype(out_dtype).itemsize

    # Row tile: big, aligned to the packed sublane multiple of the compute dtype.
    align = 8 if it >= 4 else (16 if it == 2 else 32)
    tm = min(tm_max, _round_up(max(M, 1), align))
    # Prefer >= 2 row tiles so the "parallel" axis can shard across v7x's 2 TCs.
    if tm >= M and M > align:
        tm = _round_up((M + 1) // 2, align)
    m_pad = _round_up(M, tm)
    num_row_tiles = m_pad // tm

    # Lane-dense 128-padded feature dims (zero padding is exact).
    cin_pad = _round_up(in_features, 128)
    h_pad = _round_up(hidden, 128)
    cout_pad = _round_up(out_features, 128)

    vmem_limit = int(vmem_limit_bytes) if vmem_limit_bytes else _pick_vmem_limit()
    budget = int(vmem_limit * 0.85)

    def resident_bytes():
        return (2 * tm * cin_pad * it            # x tile (double-buffered)
                + 2 * cin_pad * h_pad * it       # w1 (conservatively x2)
                + h_pad * 4                      # b1
                + 2 * h_pad * cout_pad * it      # w2 (conservatively x2)
                + cout_pad * 4                   # b2
                + 2 * tm * cout_pad * out_it     # out tile
                + tm * h_pad * 4)                # live f32 intermediate h

    def streamed_bytes(th):
        return (2 * tm * cin_pad * it
                + 2 * cin_pad * th * it
                + th * 4
                + 2 * th * cout_pad * it
                + cout_pad * 4
                + 2 * tm * cout_pad * out_it
                + tm * cout_pad * 4              # f32 accumulator
                + tm * th * 4)                   # live f32 intermediate h chunk

    use_resident = (not force_streaming) and resident_bytes() <= budget

    # Prepare operands: pre-transpose weights so the kernel does plain (M,K)@(K,N).
    x2d = x.reshape(M, in_features)
    x2d = jnp.pad(x2d, ((0, m_pad - M), (0, cin_pad - in_features)))
    w1_t = jnp.pad(w1.T, ((0, cin_pad - in_features), (0, h_pad - hidden)))
    w2_t = jnp.pad(w2.T, ((0, h_pad - hidden), (0, cout_pad - out_features)))
    b1_p = jnp.pad(b1.astype(jnp.float32), (0, h_pad - hidden)).reshape(1, h_pad)
    b2_p = jnp.pad(b2.astype(jnp.float32), (0, cout_pad - out_features)).reshape(1, cout_pad)

    if use_resident:
        grid = (num_row_tiles,)
        in_specs = [
            pl.BlockSpec((tm, cin_pad), lambda i: (i, 0)),       # x rows
            pl.BlockSpec((cin_pad, h_pad), lambda i: (0, 0)),    # w1 (resident)
            pl.BlockSpec((1, h_pad), lambda i: (0, 0)),          # b1
            pl.BlockSpec((h_pad, cout_pad), lambda i: (0, 0)),   # w2 (resident)
            pl.BlockSpec((1, cout_pad), lambda i: (0, 0)),       # b2
        ]
        out_specs = pl.BlockSpec((tm, cout_pad), lambda i: (i, 0))
        scratch_shapes = []
        dim_sem = ("parallel",)
        kernel = functools.partial(_mlp_kernel_resident,
                                   approximate_gelu=approximate_gelu)
        weight_dma_passes = 1
    else:
        # Largest hidden chunk that divides h_pad, is <= th_max and fits the budget.
        n128 = h_pad // 128
        th = 128
        for d in range(n128, 0, -1):
            cand = d * 128
            if n128 % d == 0 and cand <= th_max and streamed_bytes(cand) <= budget:
                th = cand
                break
        grid = (num_row_tiles, h_pad // th)
        in_specs = [
            pl.BlockSpec((tm, cin_pad), lambda i, j: (i, 0)),     # x rows
            pl.BlockSpec((cin_pad, th), lambda i, j: (0, j)),     # w1 chunk
            pl.BlockSpec((1, th), lambda i, j: (0, j)),           # b1 chunk
            pl.BlockSpec((th, cout_pad), lambda i, j: (j, 0)),    # w2 chunk
            pl.BlockSpec((1, cout_pad), lambda i, j: (0, 0)),     # b2
        ]
        out_specs = pl.BlockSpec((tm, cout_pad), lambda i, j: (i, 0))
        scratch_shapes = [pltpu.VMEM((tm, cout_pad), jnp.float32)]
        dim_sem = ("parallel", "arbitrary")
        kernel = functools.partial(_mlp_kernel_streamed,
                                   approximate_gelu=approximate_gelu)
        weight_dma_passes = num_row_tiles   # weight chunks re-streamed per row tile

    weight_bytes = (cin_pad * h_pad + h_pad * cout_pad) * it
    cost = pl.CostEstimate(
        flops=2 * M * (in_features * hidden + hidden * out_features),
        transcendentals=m_pad * h_pad,
        bytes_accessed=int(m_pad * cin_pad * it
                           + weight_bytes * weight_dma_passes
                           + (h_pad + cout_pad) * 4
                           + m_pad * cout_pad * out_it),
    )

    out2d = pl.pallas_call(
        kernel,
        out_shape=jax.ShapeDtypeStruct((m_pad, cout_pad), out_dtype),
        grid_spec=pltpu.PrefetchScalarGridSpec(
            num_scalar_prefetch=0,
            grid=grid,
            in_specs=in_specs,
            out_specs=out_specs,
            scratch_shapes=scratch_shapes,
        ),
        compiler_params=pltpu.CompilerParams(
            dimension_semantics=dim_sem,
            vmem_limit_bytes=vmem_limit,
        ),
        cost_estimate=cost,
    )(x2d, w1_t, b1_p, w2_t, b2_p)

    out2d = out2d[:M, :out_features]
    return out2d.reshape(*lead_shape, out_features)


if __name__ == "__main__":
    # Small shapes consistent with a transformer MLP block:
    # batch=2, seq=8 tokens, in_features=32, hidden_features=256, out_features=32
    B, N, C_IN, HID = 2, 8, 32, 256
    C_OUT = C_IN

    key = jax.random.PRNGKey(0)
    kx, kw1, kb1, kw2, kb2 = jax.random.split(key, 5)

    x = jax.random.normal(kx, (B, N, C_IN), dtype=jnp.float32)
    # Deterministic synthetic parameters (nn.Linear layout: (out, in) + (out,))
    w1 = jax.random.normal(kw1, (HID, C_IN), dtype=jnp.float32) * 0.05
    b1 = jax.random.normal(kb1, (HID,), dtype=jnp.float32) * 0.01
    w2 = jax.random.normal(kw2, (C_OUT, HID), dtype=jnp.float32) * 0.05
    b2 = jax.random.normal(kb2, (C_OUT,), dtype=jnp.float32) * 0.01

    # Pure-JAX reference (exact GELU, dropout p=0 is identity)
    h_ref = x @ w1.T + b1
    h_ref = 0.5 * h_ref * (1.0 + lax.erf(h_ref / jnp.sqrt(2.0)))
    ref = h_ref @ w2.T + b2

    # 1) Exact f32 path (weights-resident variant): tight torch parity.
    out_f32 = mlp_pallas(x, w1, b1, w2, b2, compute_dtype=jnp.float32)
    jax.block_until_ready(out_f32)
    assert out_f32.shape == (B, N, C_OUT)
    assert jnp.allclose(out_f32, ref, atol=2e-5, rtol=2e-5), "f32 resident mismatch"

    # 2) Streamed (hidden-tiled) fallback path, forced, still exact f32.
    out_stream = mlp_pallas(x, w1, b1, w2, b2, compute_dtype=jnp.float32,
                            force_streaming=True, th_max=128)
    jax.block_until_ready(out_stream)
    assert jnp.allclose(out_stream, ref, atol=2e-5, rtol=2e-5), "streamed mismatch"

    # 3) Default (auto -> bf16 MXU inputs, f32 accumulation): loose tolerance.
    out_bf16 = mlp_pallas(x, w1, b1, w2, b2)
    jax.block_until_ready(out_bf16)
    assert jnp.allclose(out_bf16, ref, atol=3e-2, rtol=3e-2), "bf16 mismatch"

    print("KERNEL_OK")
</pallas_src>

<mosaic_0001>
module attributes {stable_mosaic.version = 11 : i64} {
  func.func @_mlp_kernel_resident(%arg0: i32, %arg1: memref<8x128xf32, #tpu.memory_space<vmem>>, %arg2: memref<128x256xf32, #tpu.memory_space<vmem>>, %arg3: memref<1x256xf32, #tpu.memory_space<vmem>>, %arg4: memref<256x128xf32, #tpu.memory_space<vmem>>, %arg5: memref<1x128xf32, #tpu.memory_space<vmem>>, %arg6: memref<8x128xf32, #tpu.memory_space<vmem>>) attributes {dimension_semantics = [#tpu.dimension_semantics<parallel>], iteration_bounds = array<i64: 2>, scalar_prefetch = 0 : i64, scratch_operands = 0 : i64, tpu.core_type = #tpu.core_type<tc>, window_params = [{transform_indices = @transform_0, window_bounds = array<i64: 8, 128>}, {pipeline_mode = #tpu.pipeline_mode<synchronous>, transform_indices = @transform_1, window_bounds = array<i64: 128, 256>}, {pipeline_mode = #tpu.pipeline_mode<synchronous>, transform_indices = @transform_2, window_bounds = array<i64: 1, 256>}, {pipeline_mode = #tpu.pipeline_mode<synchronous>, transform_indices = @transform_3, window_bounds = array<i64: 256, 128>}, {pipeline_mode = #tpu.pipeline_mode<synchronous>, transform_indices = @transform_4, window_bounds = array<i64: 1, 128>}, {transform_indices = @transform_5, window_bounds = array<i64: 8, 128>}]} {
    %c0 = arith.constant 0 : index
    %c0_0 = arith.constant 0 : index
    %0 = vector.load %arg1[%c0, %c0_0] : memref<8x128xf32, #tpu.memory_space<vmem>>, vector<8x128xf32>
    %c0_1 = arith.constant 0 : index
    %c0_2 = arith.constant 0 : index
    %1 = vector.load %arg2[%c0_1, %c0_2] : memref<128x256xf32, #tpu.memory_space<vmem>>, vector<128x256xf32>
    %cst = arith.constant dense<0.000000e+00> : vector<8x256xf32>
    %2 = tpu.matmul %0, %1, %cst {dimension_numbers = #tpu.dot_dimension_numbers<[1], [0], [0], [1], [0, 0, 1, 1], [], []>} : vector<8x128xf32>, vector<128x256xf32>, vector<8x256xf32> -> vector<8x256xf32>
    %c0_3 = arith.constant 0 : index
    %c0_4 = arith.constant 0 : index
    %3 = vector.load %arg3[%c0_3, %c0_4] : memref<1x256xf32, #tpu.memory_space<vmem>>, vector<1x256xf32>
    %4 = vector.broadcast %3 : vector<1x256xf32> to vector<8x256xf32>
    %5 = arith.addf %2, %4 : vector<8x256xf32>
    %cst_5 = arith.constant 5.000000e-01 : f32
    %6 = vector.broadcast %cst_5 : f32 to vector<8x256xf32>
    %7 = arith.mulf %6, %5 : vector<8x256xf32>
    %cst_6 = arith.constant 0.707106769 : f32
    %8 = vector.broadcast %cst_6 : f32 to vector<8x256xf32>
    %9 = arith.mulf %5, %8 : vector<8x256xf32>
    %10 = math.erf %9 : vector<8x256xf32>
    %cst_7 = arith.constant 1.000000e+00 : f32
    %11 = vector.broadcast %cst_7 : f32 to vector<8x256xf32>
    %12 = arith.addf %11, %10 : vector<8x256xf32>
    %13 = arith.mulf %7, %12 : vector<8x256xf32>
    %c0_8 = arith.constant 0 : index
    %c0_9 = arith.constant 0 : index
    %14 = vector.load %arg4[%c0_8, %c0_9] : memref<256x128xf32, #tpu.memory_space<vmem>>, vector<256x128xf32>
    %cst_10 = arith.constant dense<0.000000e+00> : vector<8x128xf32>
    %15 = tpu.matmul %13, %14, %cst_10 {dimension_numbers = #tpu.dot_dimension_numbers<[1], [0], [0], [1], [0, 0, 1, 1], [], []>} : vector<8x256xf32>, vector<256x128xf32>, vector<8x128xf32> -> vector<8x128xf32>
    %c0_11 = arith.constant 0 : index
    %c0_12 = arith.constant 0 : index
    %16 = vector.load %arg5[%c0_11, %c0_12] : memref<1x128xf32, #tpu.memory_space<vmem>>, vector<1x128xf32>
    %17 = vector.broadcast %16 : vector<1x128xf32> to vector<8x128xf32>
    %18 = arith.addf %15, %17 : vector<8x128xf32>
    %c0_13 = arith.constant 0 : index
    %c0_14 = arith.constant 0 : index
    %19 = vector.load %arg6[%c0_13, %c0_14] : memref<8x128xf32, #tpu.memory_space<vmem>>, vector<8x128xf32>
    tpu.vector_store %arg6[%c0_13, %c0_14], %18 {strides = array<i32>} : memref<8x128xf32, #tpu.memory_space<vmem>>, vector<8x128xf32>,
    return
  }
  func.func @transform_0(%arg0: i32) -> (i32, i32) {
    %c0_i32 = arith.constant 0 : i32
    %c0_i32_0 = arith.constant 0 : i32
    return %arg0, %c0_i32 : i32, i32
  }
  func.func @transform_1(%arg0: i32) -> (i32, i32) {
    %c0_i32 = arith.constant 0 : i32
    %c0_i32_0 = arith.constant 0 : i32
    %c0_i32_1 = arith.constant 0 : i32
    return %c0_i32, %c0_i32_0 : i32, i32
  }
  func.func @transform_2(%arg0: i32) -> (i32, i32) {
    %c0_i32 = arith.constant 0 : i32
    %c0_i32_0 = arith.constant 0 : i32
    %c0_i32_1 = arith.constant 0 : i32
    return %c0_i32, %c0_i32_0 : i32, i32
  }
  func.func @transform_3(%arg0: i32) -> (i32, i32) {
    %c0_i32 = arith.constant 0 : i32
    %c0_i32_0 = arith.constant 0 : i32
    %c0_i32_1 = arith.constant 0 : i32
    return %c0_i32, %c0_i32_0 : i32, i32
  }
  func.func @transform_4(%arg0: i32) -> (i32, i32) {
    %c0_i32 = arith.constant 0 : i32
    %c0_i32_0 = arith.constant 0 : i32
    %c0_i32_1 = arith.constant 0 : i32
    return %c0_i32, %c0_i32_0 : i32, i32
  }
  func.func @transform_5(%arg0: i32) -> (i32, i32) {
    %c0_i32 = arith.constant 0 : i32
    %c0_i32_0 = arith.constant 0 : i32
    return %arg0, %c0_i32 : i32, i32
  }
}

</mosaic_0001>

<llo_original>
// kernel: tpu_custom_call.1
$region0: #{tpu_custom_call.1}
  #allocation0 [shape = 'u32[]', space=smem, size = 0x4, offset = 0x4, fixed_abs, tag = 'smem constant byte address 0x4 - core index']
  #allocation1 [shape = 'u32[144,128]{1,0:T(1,128)}', space=vmem, size = 0x12000, scoped, tag = 'internal scratch']
  %s0 = inlined_call_operand.hbm [shape: f32[16,128], index: 0, kind: input, shape index: {}]
  %s1 = inlined_call_operand.hbm [shape: f32[128,256], index: 1, kind: input, shape index: {}]
  %s2 = inlined_call_operand.vmem [shape: f32[1,256], index: 2, kind: input, shape index: {}]
  %s3 = inlined_call_operand.hbm [shape: f32[256,128], index: 3, kind: input, shape index: {}]
  %s4 = inlined_call_operand.vmem [shape: f32[1,128], index: 4, kind: input, shape index: {}]
  %s5 = inlined_call_operand.hbm [shape: f32[16,128], index: 5, kind: output, shape index: {}]
  %s6 = sld [smem:[#allocation0]]
  $region65: #{tpu_custom_call.1} parent=0
    _
  %s8 = ssub.s32 1, %s6
  %s9 = scalar_select 0, %s8, %s6
  $region1: #{tpu_custom_call.1} parent=0
    #allocation2 [shape = 'u8[8192]{0}', space=vmem, size = 0x2000, scoped, tag = 'input window, operand 0']
    #allocation3 [shape = 's32[2]{0}', space=sflag, size = 0x8, scoped, tag = 'scoped memory for tpu_custom_call.1']
    #allocation4 [shape = 's32[2]{0}', space=sflag, size = 0x8, scoped, tag = 'scoped memory for tpu_custom_call.1']
    #allocation5 [shape = 'u8[131072]{0}', space=vmem, size = 0x20000, scoped, tag = 'input window, operand 1, single buffered']
    #allocation6 [shape = 's32[1]{0}', space=sflag, size = 0x4, scoped, tag = 'scoped memory for tpu_custom_call.1']
    #allocation7 [shape = 'u8[131072]{0}', space=vmem, size = 0x20000, scoped, tag = 'input window, operand 3, single buffered']
    #allocation8 [shape = 'u8[8192]{0}', space=vmem, size = 0x2000, scoped, tag = 'output window, operand 0']
    %10 = vsyncpa [#allocation3], 0
    %s11 = scalar_lea.sflag [#allocation3], 1
    %12 = vsyncpa %s11, 0
    %13 = vsyncpa [#allocation6], 0
    %14 = vsyncpa [#allocation4], 0
    %s15 = scalar_lea.sflag [#allocation4], 1
    %16 = vsyncpa %s15, 0
    loop: start=0, step=1, limit=4
    $region2: #{tpu_custom_call.1} parent=1 // loop_pre_header
      _
    $region3: #{tpu_custom_call.1} parent=1 // loop_header
      %s18 = sphi 0, %s22
      %p19 = scmp.ge.s32.totalorder %s18, 4
      %s28 = sphi 0, %s30
      %s31 = sphi 0, %s28
      %s32 = sphi 0, %s31
      %s48 = sphi 0, %s32
      %s52 = sphi 0, %s52
      %s54 = sphi 0, %s52
      %s55 = sphi 0, %s54
      %s69 = sphi 0, %s55
      %s73 = sphi 0, %s73
      %s75 = sphi 0, %s73
      %s76 = sphi 0, %s75
      %s90 = sphi 0, %s76
      %s94 = sphi 0, %s94
      %s96 = sphi 0, %s94
      %s97 = sphi 0, %s96
      %s111 = sphi 0, %s97
      %s115 = sphi 0, %s115
      %s117 = sphi 0, %s115
      %s118 = sphi 0, %s117
      %s132 = sphi 0, %s118
      %s138 = sphi 0, %s140
      %s141 = sphi 0, %s138
      %s142 = sphi 0, %s141
      %s158 = sphi 0, %s142
    $region4: #{tpu_custom_call.1} parent=1 // loop_header_branch
      %21 = sbr.rel (%p19) target = $region8
    $region5: #{tpu_custom_call.1} parent=1 // loop_body
      %s23 = ssub.s32 %s18, 1
      %s24 = ssub.s32 %s18, 2
      %s25 = sadd.s32 %s18, 1
      %s26 = ssub.s32 %s18, %s25
      %p27 = scmp.eq.s32.totalorder %s26, 0
      %s29 = sadd.s32 %s28, 1
      %s30 = scalar_select %p27, %s28, %s29
      %p33 = pneg %p27
      %p34 = scmp.eq.s32.totalorder %s18, 1
      %p35 = por %p33, %p34
      %p36 = scmp.ne.s32.totalorder %s28, %s31
      %p37 = scmp.eq.s32.totalorder %s18, 0
      %p38 = por %p36, %p37
      %p39 = scmp.ne.s32.totalorder %s28, %s31
      %p40 = scmp.eq.s32.totalorder %s23, 1
      %p41 = por %p39, %p40
      %p42 = scmp.ne.s32.totalorder %s31, %s32
      %p43 = scmp.eq.s32.totalorder %s23, 0
      %p44 = por %p42, %p43
      %p45 = scmp.ne.s32.totalorder %s31, %s32
      %p46 = scmp.eq.s32.totalorder %s24, 1
      %p47 = por %p45, %p46
      %p49 = scmp.ne.s32.totalorder %s32, %s48
      %p50 = scmp.eq.s32.totalorder %s24, 0
      %p51 = por %p49, %p50
      %s53 = sadd.s32 %s52, 1
      %p56 = scmp.eq.s32.totalorder %s18, 1
      %p57 = scmp.ne.s32.totalorder %s52, %s54
      %p58 = scmp.eq.s32.totalorder %s18, 0
      %p59 = por %p57, %p58
      %p60 = scmp.ne.s32.totalorder %s52, %s54
      %p61 = scmp.eq.s32.totalorder %s23, 1
      %p62 = por %p60, %p61
      %p63 = scmp.ne.s32.totalorder %s54, %s55
      %p64 = scmp.eq.s32.totalorder %s23, 0
      %p65 = por %p63, %p64
      %p66 = scmp.ne.s32.totalorder %s54, %s55
      %p67 = scmp.eq.s32.totalorder %s24, 1
      %p68 = por %p66, %p67
      %p70 = scmp.ne.s32.totalorder %s55, %s69
      %p71 = scmp.eq.s32.totalorder %s24, 0
      %p72 = por %p70, %p71
      %s74 = sadd.s32 %s73, 1
      %p77 = scmp.eq.s32.totalorder %s18, 1
      %p78 = scmp.ne.s32.totalorder %s73, %s75
      %p79 = scmp.eq.s32.totalorder %s18, 0
      %p80 = por %p78, %p79
      %p81 = scmp.ne.s32.totalorder %s73, %s75
      %p82 = scmp.eq.s32.totalorder %s23, 1
      %p83 = por %p81, %p82
      %p84 = scmp.ne.s32.totalorder %s75, %s76
      %p85 = scmp.eq.s32.totalorder %s23, 0
      %p86 = por %p84, %p85
      %p87 = scmp.ne.s32.totalorder %s75, %s76
      %p88 = scmp.eq.s32.totalorder %s24, 1
      %p89 = por %p87, %p88
      %p91 = scmp.ne.s32.totalorder %s76, %s90
      %p92 = scmp.eq.s32.totalorder %s24, 0
      %p93 = por %p91, %p92
      %s95 = sadd.s32 %s94, 1
      %p98 = scmp.eq.s32.totalorder %s18, 1
      %p99 = scmp.ne.s32.totalorder %s94, %s96
      %p100 = scmp.eq.s32.totalorder %s18, 0
      %p101 = por %p99, %p100
      %p102 = scmp.ne.s32.totalorder %s94, %s96
      %p103 = scmp.eq.s32.totalorder %s23, 1
      %p104 = por %p102, %p103
      %p105 = scmp.ne.s32.totalorder %s96, %s97
      %p106 = scmp.eq.s32.totalorder %s23, 0
      %p107 = por %p105, %p106
      %p108 = scmp.ne.s32.totalorder %s96, %s97
      %p109 = scmp.eq.s32.totalorder %s24, 1
      %p110 = por %p108, %p109
      %p112 = scmp.ne.s32.totalorder %s97, %s111
      %p113 = scmp.eq.s32.totalorder %s24, 0
      %p114 = por %p112, %p113
      %s116 = sadd.s32 %s115, 1
      %p119 = scmp.eq.s32.totalorder %s18, 1
      %p120 = scmp.ne.s32.totalorder %s115, %s117
      %p121 = scmp.eq.s32.totalorder %s18, 0
      %p122 = por %p120, %p121
      %p123 = scmp.ne.s32.totalorder %s115, %s117
      %p124 = scmp.eq.s32.totalorder %s23, 1
      %p125 = por %p123, %p124
      %p126 = scmp.ne.s32.totalorder %s117, %s118
      %p127 = scmp.eq.s32.totalorder %s23, 0
      %p128 = por %p126, %p127
      %p129 = scmp.ne.s32.totalorder %s117, %s118
      %p130 = scmp.eq.s32.totalorder %s24, 1
      %p131 = por %p129, %p130
      %p133 = scmp.ne.s32.totalorder %s118, %s132
      %p134 = scmp.eq.s32.totalorder %s24, 0
      %p135 = por %p133, %p134
      %s136 = ssub.s32 %s18, %s25
      %p137 = scmp.eq.s32.totalorder %s136, 0
      %s139 = sadd.s32 %s138, 1
      %s140 = scalar_select %p137, %s138, %s139
      %p143 = pneg %p137
      %p144 = scmp.eq.s32.totalorder %s18, 1
      %p145 = por %p143, %p144
      %p146 = scmp.ne.s32.totalorder %s138, %s141
      %p147 = scmp.eq.s32.totalorder %s18, 0
      %p148 = por %p146, %p147
      %p149 = scmp.ne.s32.totalorder %s138, %s141
      %p150 = scmp.eq.s32.totalorder %s23, 1
      %p151 = por %p149, %p150
      %p152 = scmp.ne.s32.totalorder %s141, %s142
      %p153 = scmp.eq.s32.totalorder %s23, 0
      %p154 = por %p152, %p153
      %p155 = scmp.ne.s32.totalorder %s141, %s142
      %p156 = scmp.eq.s32.totalorder %s24, 1
      %p157 = por %p155, %p156
      %p159 = scmp.ne.s32.totalorder %s142, %s158
      %p160 = scmp.eq.s32.totalorder %s24, 0
      %p161 = por %p159, %p160
      %p162 = scmp.le.s32.totalorder 1, %s18
      %p163 = scmp.lt.s32.totalorder %s18, 3
      %p164 = pnand %p162, %p163
      %p165 = pneg %p164
      // Predicated region
      $region9: #{tpu_custom_call.1} parent=5 // pred_check
        _
      $region10: #{tpu_custom_call.1} parent=5 // pred_check_branch
        %167 = sbr.rel (%p164) target = $region12
      $region11: #{tpu_custom_call.1} parent=5 // pred_region
        %s168 = ssub.s32 %s18, 1
        // Predicated region
        $region13: #{tpu_custom_call.1} parent=11 // pred_check
          %p169 = pneg %p65
        $region14: #{tpu_custom_call.1} parent=11 // pred_check_branch
          %171 = sbr.rel (%p169) target = $region16
        $region15: #{tpu_custom_call.1} parent=11 // pred_region
          %s173 = ssub.s32 4096, 4096
          %174 = vsyncadd [#allocation6], %s173
          %s175 = sshll.u32 [#allocation5], 4
          %s176 = int_to_ptr.vmem [resolvable:$true] %s175
          %181 = dma.hbm_to_vmem [thread:$0]  %s1, 4096, %s176, [#allocation6], 256, 256, 16
        $region16: #{tpu_custom_call.1} parent=11 // pred_fallthru
          _
        // Predicated region
        $region17: #{tpu_custom_call.1} parent=11 // pred_check
          %p182 = pneg %p86
        $region18: #{tpu_custom_call.1} parent=11 // pred_check_branch
          %184 = sbr.rel (%p182) target = $region20
        $region19: #{tpu_custom_call.1} parent=11 // pred_region
          _
        $region20: #{tpu_custom_call.1} parent=11 // pred_fallthru
          _
        // Predicated region
        $region21: #{tpu_custom_call.1} parent=11 // pred_check
          %p185 = pneg %p107
        $region22: #{tpu_custom_call.1} parent=11 // pred_check_branch
          %187 = sbr.rel (%p185) target = $region24
        $region23: #{tpu_custom_call.1} parent=11 // pred_region
          %s189 = ssub.s32 4096, 4096
          %190 = vsyncadd [#allocation6], %s189
          %s191 = sshll.u32 [#allocation7], 4
          %s192 = int_to_ptr.vmem [resolvable:$true] %s191
          %197 = dma.hbm_to_vmem [thread:$0]  %s3, 4096, %s192, [#allocation6], 128, 128, 8
        $region24: #{tpu_custom_call.1} parent=11 // pred_fallthru
          _
        // Predicated region
        $region25: #{tpu_custom_call.1} parent=11 // pred_check
          %p198 = pneg %p128
        $region26: #{tpu_custom_call.1} parent=11 // pred_check_branch
          %200 = sbr.rel (%p198) target = $region28
        $region27: #{tpu_custom_call.1} parent=11 // pred_region
          _
        $region28: #{tpu_custom_call.1} parent=11 // pred_fallthru
          _
      $region12: #{tpu_custom_call.1} parent=5 // pred_fallthru
        _
      %p201 = scmp.lt.s32.totalorder %s18, 2
      // Predicated region
      $region29: #{tpu_custom_call.1} parent=5 // pred_check
        %p202 = pneg %p201
      $region30: #{tpu_custom_call.1} parent=5 // pred_check_branch
        %204 = sbr.rel (%p202) target = $region32
      $region31: #{tpu_custom_call.1} parent=5 // pred_region
        // Predicated region
        $region33: #{tpu_custom_call.1} parent=31 // pred_check
          %p205 = pneg %p38
        $region34: #{tpu_custom_call.1} parent=31 // pred_check_branch
          %207 = sbr.rel (%p205) target = $region36
        $region35: #{tpu_custom_call.1} parent=31 // pred_region
          %s208 = sand.u32 %s28, 1
          %s209 = scalar_lea.sflag [#allocation3], %s208
          %s210 = sand.u32 %s28, 1
          %s211 = smul.addr %s210, 8
          %s212 = scalar_lea.vmem [#allocation2], %s211
          %s214 = ssub.s32 128, 128
          %215 = vsyncadd %s209, %s214
          %s216 = smul.addr %s18, 128
          %s217 = scalar_lea.hbm %s0, %s216
          %s219 = sshll.u32 %s212, 4
          %s220 = int_to_ptr.vmem [resolvable:$true] %s219
          %222 = dma.hbm_to_vmem [thread:$0]  %s217, 128, %s220, %s209
        $region36: #{tpu_custom_call.1} parent=31 // pred_fallthru
          _
      $region32: #{tpu_custom_call.1} parent=5 // pred_fallthru
        _
      %p223 = scmp.le.s32.totalorder 1, %s18
      %p224 = scmp.lt.s32.totalorder %s18, 3
      %p225 = pnand %p223, %p224
      %p226 = pneg %p225
      // Predicated region
      $region37: #{tpu_custom_call.1} parent=5 // pred_check
        _
      $region38: #{tpu_custom_call.1} parent=5 // pred_check_branch
        %228 = sbr.rel (%p225) target = $region40
      $region39: #{tpu_custom_call.1} parent=5 // pred_region
        %s229 = ssub.s32 %s18, 1
        %s230 = sand.u32 %s31, 1
        %s231 = scalar_lea.sflag [#allocation3], %s230
        %s232 = sand.u32 %s31, 1
        %s233 = smul.addr %s232, 8
        %s234 = scalar_lea.vmem [#allocation2], %s233
        // Predicated region
        $region41: #{tpu_custom_call.1} parent=39 // pred_check
          %p235 = pneg %p44
        $region42: #{tpu_custom_call.1} parent=39 // pred_check_branch
          %237 = sbr.rel (%p235) target = $region44
        $region43: #{tpu_custom_call.1} parent=39 // pred_region
          %238 = dma.done %s231, 128
        $region44: #{tpu_custom_call.1} parent=39 // pred_fallthru
          _
        // Predicated region
        $region45: #{tpu_custom_call.1} parent=39 // pred_check
          %p239 = pneg %p65
        $region46: #{tpu_custom_call.1} parent=39 // pred_check_branch
          %241 = sbr.rel (%p239) target = $region48
        $region47: #{tpu_custom_call.1} parent=39 // pred_region
          %242 = dma.done [#allocation6], 4096
        $region48: #{tpu_custom_call.1} parent=39 // pred_fallthru
          _
        // Predicated region
        $region49: #{tpu_custom_call.1} parent=39 // pred_check
          %p243 = pneg %p107
        $region50: #{tpu_custom_call.1} parent=39 // pred_check_branch
          %245 = sbr.rel (%p243) target = $region52
        $region51: #{tpu_custom_call.1} parent=39 // pred_region
          %246 = dma.done [#allocation6], 4096
        $region52: #{tpu_custom_call.1} parent=39 // pred_fallthru
          _
        %s247 = sand.u32 %s31, 1
        %s248 = scalar_lea.sflag [#allocation3], %s247
        %s249 = sand.u32 %s31, 1
        %s250 = smul.addr %s249, 8
        %s251 = scalar_lea.vmem [#allocation2], %s250
        %p252 = pneg %p44
        %p253 = pneg %p41
        %p254 = pneg %p65
        %p255 = pneg %p62
        %p256 = pneg %p86
        %p257 = pneg %p83
        %p258 = pneg %p107
        %p259 = pneg %p104
        %p260 = pneg %p128
        %p261 = pneg %p125
        %p262 = pneg %p154
        %p263 = pneg %p151
        %s264 = sand.u32 %s141, 1
        %s265 = scalar_lea.sflag [#allocation4], %s264
        %s266 = sand.u32 %s141, 1
        %s267 = smul.addr %s266, 8
        %s268 = scalar_lea.vmem [#allocation8], %s267
        %v269 = vld [vmem:[%s234] sm:$0xff]
        %v270 = vld [vmem:[#allocation5] sm:$0xff]
        %v271 = vld [vmem:[#allocation5 + $0x8] sm:$0xff]
        %v272 = vld [vmem:[#allocation5 + $0x10] sm:$0xff]
        %v273 = vld [vmem:[#allocation5 + $0x18] sm:$0xff]
        %v274 = vld [vmem:[#allocation5 + $0x20] sm:$0xff]
        %v275 = vld [vmem:[#allocation5 + $0x28] sm:$0xff]
        %v276 = vld [vmem:[#allocation5 + $0x30] sm:$0xff]
        %v277 = vld [vmem:[#allocation5 + $0x38] sm:$0xff]
        %v278 = vld [vmem:[#allocation5 + $0x40] sm:$0xff]
        %v279 = vld [vmem:[#allocation5 + $0x48] sm:$0xff]
        %v280 = vld [vmem:[#allocation5 + $0x50] sm:$0xff]
        %v281 = vld [vmem:[#allocation5 + $0x58] sm:$0xff]
        %v282 = vld [vmem:[#allocation5 + $0x60] sm:$0xff]
        %v283 = vld [vmem:[#allocation5 + $0x68] sm:$0xff]
        %v284 = vld [vmem:[#allocation5 + $0x70] sm:$0xff]
        %v285 = vld [vmem:[#allocation5 + $0x78] sm:$0xff]
        %v286 = vld [vmem:[#allocation5 + $0x80] sm:$0xff]
        %v287 = vld [vmem:[#allocation5 + $0x88] sm:$0xff]
        %v288 = vld [vmem:[#allocation5 + $0x90] sm:$0xff]
        %v289 = vld [vmem:[#allocation5 + $0x98] sm:$0xff]
        %v290 = vld [vmem:[#allocation5 + $0xa0] sm:$0xff]
        %v291 = vld [vmem:[#allocation5 + $0xa8] sm:$0xff]
        %v292 = vld [vmem:[#allocation5 + $0xb0] sm:$0xff]
        %v293 = vld [vmem:[#allocation5 + $0xb8] sm:$0xff]
        %v294 = vld [vmem:[#allocation5 + $0xc0] sm:$0xff]
        %v295 = vld [vmem:[#allocation5 + $0xc8] sm:$0xff]
        %v296 = vld [vmem:[#allocation5 + $0xd0] sm:$0xff]
        %v297 = vld [vmem:[#allocation5 + $0xd8] sm:$0xff]
        %v298 = vld [vmem:[#allocation5 + $0xe0] sm:$0xff]
        %v299 = vld [vmem:[#allocation5 + $0xe8] sm:$0xff]
        %v300 = vld [vmem:[#allocation5 + $0xf0] sm:$0xff]
        %v301 = vld [vmem:[#allocation5 + $0xf8] sm:$0xff]
        %v302 = vld [vmem:[%s2] sm:$0x3]
        %v304 = vlaneseq
        %v305 = vshrl.u32 %v304, 7
        %v306 = vsub.s32 0, %v305
        %v307 = vrot.slane %v302, %v306
        %v308 = vlaneseq
        %v309 = vshrl.u32 %v308, 7
        %v310 = vsub.s32 1, %v309
        %v311 = vrot.slane %v302, %v310
        %314 = vmatprep.subr.mxu0 %v271
        %315 = vmatpush1.msra.mxu0 %v270
        %316 = vmatprep.subr.mxu0 %v273
        %317 = vmatpush1.msra.mxu0 %v272
        %318 = vmatprep.subr.mxu0 %v275
        %319 = vmatpush1.msra.mxu0 %v274
        %320 = vmatprep.subr.mxu0 %v277
        %321 = vmatpush1.msra.mxu0 %v276
        %322 = vmatprep.subr.mxu0 %v279
        %323 = vmatpush1.msra.mxu0 %v278
        %324 = vmatprep.subr.mxu0 %v281
        %325 = vmatpush1.msra.mxu0 %v280
        %326 = vmatprep.subr.mxu0 %v283
        %327 = vmatpush1.msra.mxu0 %v282
        %328 = vmatprep.subr.mxu0 %v285
        %329 = vmatpush1.msra.mxu0 %v284
        %330 = vmatprep.subr.mxu0 %v287
        %331 = vmatpush1.msra.mxu0 %v286
        %332 = vmatprep.subr.mxu0 %v289
        %333 = vmatpush1.msra.mxu0 %v288
        %334 = vmatprep.subr.mxu0 %v291
        %335 = vmatpush1.msra.mxu0 %v290
        %336 = vmatprep.subr.mxu0 %v293
        %337 = vmatpush1.msra.mxu0 %v292
        %338 = vmatprep.subr.mxu0 %v295
        %339 = vmatpush1.msra.mxu0 %v294
        %340 = vmatprep.subr.mxu0 %v297
        %341 = vmatpush1.msra.mxu0 %v296
        %342 = vmatprep.subr.mxu0 %v299
        %343 = vmatpush1.msra.mxu0 %v298
        %344 = vmatprep.subr.mxu0 %v301
        %345 = vmatpush1.msra.mxu0 %v300
        %346 = vmatprep.subr.mxu0 0.0
        %347 = vmatpush1.msra.mxu0 0.0
        %348 = vmatprep.subr.mxu0 0.0
        %349 = vmatpush1.msra.mxu0 0.0
        %350 = vmatprep.subr.mxu0 0.0
        %351 = vmatpush1.msra.mxu0 0.0
        %352 = vmatprep.subr.mxu0 0.0
        %353 = vmatpush1.msra.mxu0 0.0
        %354 = vmatprep.subr.mxu0 0.0
        %355 = vmatpush1.msra.mxu0 0.0
        %356 = vmatprep.subr.mxu0 0.0
        %357 = vmatpush1.msra.mxu0 0.0
        %358 = vmatprep.subr.mxu0 0.0
        %359 = vmatpush1.msra.mxu0 0.0
        %360 = vmatprep.subr.mxu0 0.0
        %361 = vmatpush1.msra.mxu0 0.0
        %362 = vmatprep.subr.mxu0 0.0
        %363 = vmatpush1.msra.mxu0 0.0
        %364 = vmatprep.subr.mxu0 0.0
        %365 = vmatpush1.msra.mxu0 0.0
        %366 = vmatprep.subr.mxu0 0.0
        %367 = vmatpush1.msra.mxu0 0.0
        %368 = vmatprep.subr.mxu0 0.0
        %369 = vmatpush1.msra.mxu0 0.0
        %370 = vmatprep.subr.mxu0 0.0
        %371 = vmatpush1.msra.mxu0 0.0
        %372 = vmatprep.subr.mxu0 0.0
        %373 = vmatpush1.msra.mxu0 0.0
        %374 = vmatprep.subr.mxu0 0.0
        %375 = vmatpush1.msra.mxu0 0.0
        %376 = vmatprep.subr.mxu0 0.0
        %377 = vmatpush1.msra.mxu0 0.0
        %378 = vmatprep.mubr.f32.mxu0 0.0
        %379 = vmatmul.mubr.f32.gmra.mrb[0].mxu0 %v269
        %v380 = vpop.f32.mrb[0].mxu0
        %v381 = vadd.f32 %v307, %v380
        %v382 = vpop.f32.mrb[0].mxu0
        %v383 = vadd.f32 %v311, %v382
        %384 = vdwg.mxu0
        %v385 = vmul.f32 %v381, 0.5
        %v386 = vmul.f32 %v383, 0.5
        %v387 = vmul.f32 %v381, 0.70710677
        %v388 = vmul.f32 %v383, 0.70710677
        %v389 = verf.f32.pop %v387
        %v390 = verf.f32.pop %v388
        %v391 = vadd.f32 %v389, 1.0
        %v392 = vadd.f32 %v390, 1.0
        %v393 = vmul.f32 %v385, %v391
        %v394 = vmul.f32 %v386, %v392
        %v395 = vld [vmem:[#allocation7] sm:$0xff]
        %v396 = vld [vmem:[#allocation7 + $0x8] sm:$0xff]
        %v397 = vld [vmem:[#allocation7 + $0x10] sm:$0xff]
        %v398 = vld [vmem:[#allocation7 + $0x18] sm:$0xff]
        %v399 = vld [vmem:[#allocation7 + $0x20] sm:$0xff]
        %v400 = vld [vmem:[#allocation7 + $0x28] sm:$0xff]
        %v401 = vld [vmem:[#allocation7 + $0x30] sm:$0xff]
        %v402 = vld [vmem:[#allocation7 + $0x38] sm:$0xff]
        %v403 = vld [vmem:[#allocation7 + $0x40] sm:$0xff]
        %v404 = vld [vmem:[#allocation7 + $0x48] sm:$0xff]
        %v405 = vld [vmem:[#allocation7 + $0x50] sm:$0xff]
        %v406 = vld [vmem:[#allocation7 + $0x58] sm:$0xff]
        %v407 = vld [vmem:[#allocation7 + $0x60] sm:$0xff]
        %v408 = vld [vmem:[#allocation7 + $0x68] sm:$0xff]
        %v409 = vld [vmem:[#allocation7 + $0x70] sm:$0xff]
        %v410 = vld [vmem:[#allocation7 + $0x78] sm:$0xff]
        %v411 = vld [vmem:[#allocation7 + $0x80] sm:$0xff]
        %v412 = vld [vmem:[#allocation7 + $0x88] sm:$0xff]
        %v413 = vld [vmem:[#allocation7 + $0x90] sm:$0xff]
        %v414 = vld [vmem:[#allocation7 + $0x98] sm:$0xff]
        %v415 = vld [vmem:[#allocation7 + $0xa0] sm:$0xff]
        %v416 = vld [vmem:[#allocation7 + $0xa8] sm:$0xff]
        %v417 = vld [vmem:[#allocation7 + $0xb0] sm:$0xff]
        %v418 = vld [vmem:[#allocation7 + $0xb8] sm:$0xff]
        %v419 = vld [vmem:[#allocation7 + $0xc0] sm:$0xff]
        %v420 = vld [vmem:[#allocation7 + $0xc8] sm:$0xff]
        %v421 = vld [vmem:[#allocation7 + $0xd0] sm:$0xff]
        %v422 = vld [vmem:[#allocation7 + $0xd8] sm:$0xff]
        %v423 = vld [vmem:[#allocation7 + $0xe0] sm:$0xff]
        %v424 = vld [vmem:[#allocation7 + $0xe8] sm:$0xff]
        %v425 = vld [vmem:[#allocation7 + $0xf0] sm:$0xff]
        %v426 = vld [vmem:[#allocation7 + $0xf8] sm:$0xff]
        %v427 = vld [vmem:[%s4] sm:$0x1]
        %v429 = vlaneseq
        %v430 = vshrl.u32 %v429, 7
        %v431 = vsub.s32 0, %v430
        %v432 = vrot.slane %v427, %v431
        %434 = vmatprep.subr.mxu0 0.0
        %435 = vmatpush1.msra.mxu0 %v395
        %436 = vmatprep.subr.mxu0 0.0
        %437 = vmatpush1.msra.mxu0 %v396
        %438 = vmatprep.subr.mxu0 0.0
        %439 = vmatpush1.msra.mxu0 %v397
        %440 = vmatprep.subr.mxu0 0.0
        %441 = vmatpush1.msra.mxu0 %v398
        %442 = vmatprep.subr.mxu0 0.0
        %443 = vmatpush1.msra.mxu0 %v399
        %444 = vmatprep.subr.mxu0 0.0
        %445 = vmatpush1.msra.mxu0 %v400
        %446 = vmatprep.subr.mxu0 0.0
        %447 = vmatpush1.msra.mxu0 %v401
        %448 = vmatprep.subr.mxu0 0.0
        %449 = vmatpush1.msra.mxu0 %v402
        %450 = vmatprep.subr.mxu0 0.0
        %451 = vmatpush1.msra.mxu0 %v403
        %452 = vmatprep.subr.mxu0 0.0
        %453 = vmatpush1.msra.mxu0 %v404
        %454 = vmatprep.subr.mxu0 0.0
        %455 = vmatpush1.msra.mxu0 %v405
        %456 = vmatprep.subr.mxu0 0.0
        %457 = vmatpush1.msra.mxu0 %v406
        %458 = vmatprep.subr.mxu0 0.0
        %459 = vmatpush1.msra.mxu0 %v407
        %460 = vmatprep.subr.mxu0 0.0
        %461 = vmatpush1.msra.mxu0 %v408
        %462 = vmatprep.subr.mxu0 0.0
        %463 = vmatpush1.msra.mxu0 %v409
        %464 = vmatprep.subr.mxu0 0.0
        %465 = vmatpush1.msra.mxu0 %v410
        %466 = vmatprep.subr.mxu0 0.0
        %467 = vmatpush1.msra.mxu0 %v411
        %468 = vmatprep.subr.mxu0 0.0
        %469 = vmatpush1.msra.mxu0 %v412
        %470 = vmatprep.subr.mxu0 0.0
        %471 = vmatpush1.msra.mxu0 %v413
        %472 = vmatprep.subr.mxu0 0.0
        %473 = vmatpush1.msra.mxu0 %v414
        %474 = vmatprep.subr.mxu0 0.0
        %475 = vmatpush1.msra.mxu0 %v415
        %476 = vmatprep.subr.mxu0 0.0
        %477 = vmatpush1.msra.mxu0 %v416
        %478 = vmatprep.subr.mxu0 0.0
        %479 = vmatpush1.msra.mxu0 %v417
        %480 = vmatprep.subr.mxu0 0.0
        %481 = vmatpush1.msra.mxu0 %v418
        %482 = vmatprep.subr.mxu0 0.0
        %483 = vmatpush1.msra.mxu0 %v419
        %484 = vmatprep.subr.mxu0 0.0
        %485 = vmatpush1.msra.mxu0 %v420
        %486 = vmatprep.subr.mxu0 0.0
        %487 = vmatpush1.msra.mxu0 %v421
        %488 = vmatprep.subr.mxu0 0.0
        %489 = vmatpush1.msra.mxu0 %v422
        %490 = vmatprep.subr.mxu0 0.0
        %491 = vmatpush1.msra.mxu0 %v423
        %492 = vmatprep.subr.mxu0 0.0
        %493 = vmatpush1.msra.mxu0 %v424
        %494 = vmatprep.subr.mxu0 0.0
        %495 = vmatpush1.msra.mxu0 %v425
        %496 = vmatprep.subr.mxu0 0.0
        %497 = vmatpush1.msra.mxu0 %v426
        %498 = vmatprep.mubr.f32.mxu0 %v394
        %499 = vmatmul.mubr.f32.gmra.mrb[0].mxu0 %v393
        %v500 = vpop.f32.mrb[0].mxu0
        %v501 = vadd.f32 %v432, %v500
        %v502 = vpop.f32.mrb[0].mxu0
        %503 = vdwg.mxu0
        %504 = vst [vmem:[%s268] sm:$0xff] %v501
        %s505 = sand.u32 %s141, 1
        %s506 = scalar_lea.sflag [#allocation4], %s505
        %s507 = sand.u32 %s141, 1
        %s508 = smul.addr %s507, 8
        %s509 = scalar_lea.vmem [#allocation8], %s508
        // Predicated region
        $region53: #{tpu_custom_call.1} parent=39 // pred_check
          %p510 = pneg %p151
        $region54: #{tpu_custom_call.1} parent=39 // pred_check_branch
          %512 = sbr.rel (%p510) target = $region56
        $region55: #{tpu_custom_call.1} parent=39 // pred_region
          %s514 = ssub.s32 128, 128
          %515 = vsyncadd %s506, %s514
          %s516 = smul.addr %s23, 128
          %s517 = scalar_lea.hbm %s5, %s516
          %s519 = sshll.u32 %s509, 4
          %s520 = int_to_ptr.vmem [resolvable:$true] %s519
          %522 = dma.vmem_to_hbm [thread:$0]  %s520, 128, %s517, %s506
        $region56: #{tpu_custom_call.1} parent=39 // pred_fallthru
          _
      $region40: #{tpu_custom_call.1} parent=5 // pred_fallthru
        _
      %p523 = scmp.le.s32.totalorder 2, %s18
      // Predicated region
      $region57: #{tpu_custom_call.1} parent=5 // pred_check
        %p524 = pneg %p523
      $region58: #{tpu_custom_call.1} parent=5 // pred_check_branch
        %526 = sbr.rel (%p524) target = $region60
      $region59: #{tpu_custom_call.1} parent=5 // pred_region
        %s527 = ssub.s32 %s18, 2
        // Predicated region
        $region61: #{tpu_custom_call.1} parent=59 // pred_check
          %p528 = pneg %p157
        $region62: #{tpu_custom_call.1} parent=59 // pred_check_branch
          %530 = sbr.rel (%p528) target = $region64
        $region63: #{tpu_custom_call.1} parent=59 // pred_region
          %s531 = sand.u32 %s142, 1
          %s532 = scalar_lea.sflag [#allocation4], %s531
          %s533 = sand.u32 %s142, 1
          %s534 = smul.addr %s533, 8
          %s535 = scalar_lea.vmem [#allocation8], %s534
          %536 = dma.done %s532, 128
        $region64: #{tpu_custom_call.1} parent=59 // pred_fallthru
          _
      $region60: #{tpu_custom_call.1} parent=5 // pred_fallthru
        _
    $region6: #{tpu_custom_call.1} parent=1 // loop_footer
      %s22 = sadd.s32 1, %s18
    $region7: #{tpu_custom_call.1} parent=1 // loop_footer_branch
      %17 = sbr.rel target = $region3
    $region8: #{tpu_custom_call.1} parent=1 // loop_exit
      _
    %537 = vsyncpa [#allocation3], 1
    %s538 = scalar_lea.sflag [#allocation3], 1
    %539 = vsyncpa %s538, 1
    %540 = vsyncpa [#allocation6], 1
    %541 = vsyncpa [#allocation4], 1
    %s542 = scalar_lea.sflag [#allocation4], 1
    %543 = vsyncpa %s542, 1

</llo_original>
